<compile_context>
chip_gen: v7x
topology: tpu7x:2x2x1
jax: 0.10.0
libtpu: 0.0.40
codegen_flags: <defaults>
</compile_context>

<pallas_src>
import jax
import jax.numpy as jnp
from jax.experimental import pallas as pl
from jax.experimental.pallas import tpu as pltpu

LANE = 128    # TPU lane width: padding target for hidden / action dims
B_BLK = 256   # batch block for the gridded (dual-TensorCore) path


def policy_mlp_kernel(x_ref, w1_ref, b1_ref, w2_ref, b2_ref, o_ref):
    """o = relu(x @ W1 + b1) @ W2 + b2 on 128-padded hidden/action dims."""
    x = x_ref[...]                                # (B, D_in) f32
    w1 = w1_ref[...].astype(jnp.float32)          # (D_in, Hp) bf16 -> f32 (cheap cast)
    # Layer 1: D_in (=4) broadcast MACs on the VPU; avoids MXU fill/drain for a
    # K=4 matmul.  Statically unrolled (D_in is tiny).  Epilogue stays f32.
    h = b1_ref[...]                               # (1, Hp) f32
    for k in range(x_ref.shape[1]):
        h = h + x[:, k:k + 1] * w1[k:k + 1, :]    # (B, Hp) f32
    h = jnp.maximum(h, 0.0)
    # Layer 2: bf16 MXU matmul with f32 accumulation.
    out = jnp.dot(h.astype(jnp.bfloat16), w2_ref[...],
                  preferred_element_type=jnp.float32)
    o_ref[...] = (out + b2_ref[...]).astype(o_ref.dtype)   # lane-dense store


def init_padded_params(w1, b1, w2, b2):
    """Pad hidden/action dims to the 128-lane width ONCE (canonical params).

    Weights are stored in bf16 to halve HBM->VMEM traffic; biases stay f32 so
    the elementwise epilogue is exact on all generations.
    """
    d_in, h = w1.shape
    a = w2.shape[1]
    hp = pl.cdiv(h, LANE) * LANE
    ap = pl.cdiv(a, LANE) * LANE
    w1p = jnp.zeros((d_in, hp), jnp.bfloat16).at[:, :h].set(w1.astype(jnp.bfloat16))
    b1p = jnp.zeros((1, hp), jnp.float32).at[:, :h].set(b1.astype(jnp.float32))
    w2p = jnp.zeros((hp, ap), jnp.bfloat16).at[:h, :a].set(w2.astype(jnp.bfloat16))
    b2p = jnp.zeros((1, ap), jnp.float32).at[:, :a].set(b2.astype(jnp.float32))
    return {"w1p": w1p, "b1p": b1p, "w2p": w2p, "b2p": b2p}


def _forward_padded(x, w1p, b1p, w2p, b2p):
    """(B, D_in) f32 -> (B, Ap) f32 padded logits (padded lanes are exactly 0)."""
    b, d_in = x.shape
    hp = w1p.shape[1]
    ap = w2p.shape[1]
    out_shape = jax.ShapeDtypeStruct((b, ap), jnp.float32)

    if b % B_BLK == 0 and b // B_BLK >= 2:
        # Large batch: 1-D parallel grid over the batch so v7x's two TensorCores
        # both get work; on single-TC chips the steps just pipeline.
        return pl.pallas_call(
            policy_mlp_kernel,
            out_shape=out_shape,
            grid=(b // B_BLK,),
            in_specs=[
                pl.BlockSpec((B_BLK, d_in), lambda i: (i, 0)),
                pl.BlockSpec((d_in, hp), lambda i: (0, 0)),
                pl.BlockSpec((1, hp), lambda i: (0, 0)),
                pl.BlockSpec((hp, ap), lambda i: (0, 0)),
                pl.BlockSpec((1, ap), lambda i: (0, 0)),
            ],
            out_specs=pl.BlockSpec((B_BLK, ap), lambda i: (i, 0)),
            compiler_params=pltpu.CompilerParams(
                dimension_semantics=("parallel",)),
        )(x, w1p, b1p, w2p, b2p)

    # Modest batch: grid-less call, whole arrays resident in VMEM
    # (footprint is a few hundred KiB, far under 64 MiB (v7x) / 128 MiB (v5e/v6e)).
    vspec = pl.BlockSpec(memory_space=pltpu.MemorySpace.VMEM)
    return pl.pallas_call(
        policy_mlp_kernel,
        out_shape=out_shape,
        in_specs=[vspec] * 5,
        out_specs=vspec,
    )(x, w1p, b1p, w2p, b2p)


forward_padded = jax.jit(_forward_padded)


def policy_network_forward(x, params, nb_actions):
    """nn.Module.forward semantics: returns (B, nb_actions) logits.

    The lane-sparse slice happens exactly once, at the host boundary; on-device
    consumers should use forward_padded + an action mask instead (see rollout).
    """
    out_p = forward_padded(x, params["w1p"], params["b1p"],
                           params["w2p"], params["b2p"])
    return out_p[:, :nb_actions]


def _rollout_scan(params, action_mask, obs0, steps):
    """Toy on-device rollout: `steps` policy evaluations inside one lax.scan so
    the weights are laid out once and there is a single dispatch chain (replaces
    the per-env-step host loop).  Consumes the padded logits with a mask -- no
    lane-sparse slicing inside the loop."""
    w1p, b1p, w2p, b2p = params["w1p"], params["b1p"], params["w2p"], params["b2p"]

    def step(obs, _):
        logits_p = _forward_padded(obs, w1p, b1p, w2p, b2p)          # (B, Ap)
        s = jnp.sum(logits_p * action_mask, axis=1, keepdims=True)   # masked consume
        next_obs = jnp.tanh(obs * (1.0 + 0.01 * s))                  # stand-in env step
        return next_obs, s

    return jax.lax.scan(step, obs0, None, length=steps)


rollout_scan = jax.jit(_rollout_scan, static_argnames="steps")
# TODO(synk): a real training loop would also fold action sampling / returns into
# this scan; gym interaction itself stays on the host.


if __name__ == "__main__":
    # CartPole-v0: observation dim = 4, nb_actions = 2, hidden_size = 100.
    input_size, hidden_size, nb_actions = 4, 100, 2

    key = jax.random.PRNGKey(0)
    kx1, kx2, kx3, k1, k2, k3, k4 = jax.random.split(key, 7)

    # Deterministic parameter init (uniform like nn.Linear's default range).
    bound1 = 1.0 / (input_size ** 0.5)
    bound2 = 1.0 / (hidden_size ** 0.5)
    w1 = jax.random.uniform(k1, (input_size, hidden_size), jnp.float32, -bound1, bound1)
    b1 = jax.random.uniform(k2, (hidden_size,), jnp.float32, -bound1, bound1)
    w2 = jax.random.uniform(k3, (hidden_size, nb_actions), jnp.float32, -bound2, bound2)
    b2 = jax.random.uniform(k4, (nb_actions,), jnp.float32, -bound2, bound2)

    # One-time padded / bf16 parameter build (canonical params from here on).
    params = init_padded_params(w1, b1, w2, b2)

    # Matched-precision reference: same bf16 rounding of weights / hidden acts.
    def ref_forward(x):
        w1f = w1.astype(jnp.bfloat16).astype(jnp.float32)
        h = jnp.maximum(x @ w1f + b1, 0.0)
        return jnp.dot(h.astype(jnp.bfloat16), w2.astype(jnp.bfloat16),
                       preferred_element_type=jnp.float32) + b2

    # 1) Large batch (multiple of 256) -> gridded, dual-TensorCore path.
    x_big = jax.random.normal(kx1, (512, input_size), jnp.float32)
    out_big = jax.block_until_ready(policy_network_forward(x_big, params, nb_actions))
    assert out_big.shape == (512, nb_actions)
    assert jnp.allclose(out_big, ref_forward(x_big), atol=2e-3, rtol=2e-3)
    # Loose sanity check against the pure-f32 math of the original module.
    ref_f32 = jnp.maximum(x_big @ w1 + b1, 0.0) @ w2 + b2
    assert jnp.allclose(out_big, ref_f32, atol=5e-2, rtol=5e-2)

    # 2) Small batch -> grid-less whole-array-in-VMEM path.
    x_small = jax.random.normal(kx2, (8, input_size), jnp.float32)
    out_small = jax.block_until_ready(policy_network_forward(x_small, params, nb_actions))
    assert out_small.shape == (8, nb_actions)
    assert jnp.allclose(out_small, ref_forward(x_small), atol=2e-3, rtol=2e-3)

    # 3) On-device rollout: one lax.scan dispatch chain instead of a host loop.
    steps = 4
    obs0 = jax.random.normal(kx3, (128, input_size), jnp.float32)
    action_mask = (jnp.arange(params["w2p"].shape[1]) < nb_actions
                   ).astype(jnp.float32)[None, :]
    final_obs, scores = rollout_scan(params, action_mask, obs0, steps=steps)
    final_obs = jax.block_until_ready(final_obs)

    def ref_step(obs, _):
        s = jnp.sum(ref_forward(obs), axis=1, keepdims=True)
        return jnp.tanh(obs * (1.0 + 0.01 * s)), s

    ref_final, ref_scores = jax.lax.scan(ref_step, obs0, None, length=steps)
    assert jnp.allclose(final_obs, ref_final, atol=2e-3, rtol=2e-3)
    assert jnp.allclose(scores, ref_scores, atol=2e-3, rtol=2e-3)

    print("KERNEL_OK")
</pallas_src>

<mosaic_0001>
module attributes {stable_mosaic.version = 11 : i64} {
  func.func @policy_mlp_kernel(%arg0: i32, %arg1: memref<256x4xf32, #tpu.memory_space<vmem>>, %arg2: memref<4x128xbf16, #tpu.memory_space<vmem>>, %arg3: memref<1x128xf32, #tpu.memory_space<vmem>>, %arg4: memref<128x128xbf16, #tpu.memory_space<vmem>>, %arg5: memref<1x128xf32, #tpu.memory_space<vmem>>, %arg6: memref<256x128xf32, #tpu.memory_space<vmem>>) attributes {dimension_semantics = [#tpu.dimension_semantics<parallel>], iteration_bounds = array<i64: 2>, scalar_prefetch = 0 : i64, scratch_operands = 0 : i64, tpu.core_type = #tpu.core_type<tc>, window_params = [{transform_indices = @transform_0, window_bounds = array<i64: 256, 4>}, {pipeline_mode = #tpu.pipeline_mode<synchronous>, transform_indices = @transform_1, window_bounds = array<i64: 4, 128>}, {pipeline_mode = #tpu.pipeline_mode<synchronous>, transform_indices = @transform_2, window_bounds = array<i64: 1, 128>}, {pipeline_mode = #tpu.pipeline_mode<synchronous>, transform_indices = @transform_3, window_bounds = array<i64: 128, 128>}, {pipeline_mode = #tpu.pipeline_mode<synchronous>, transform_indices = @transform_4, window_bounds = array<i64: 1, 128>}, {transform_indices = @transform_5, window_bounds = array<i64: 256, 128>}]} {
    %c0 = arith.constant 0 : index
    %c0_0 = arith.constant 0 : index
    %0 = vector.load %arg1[%c0, %c0_0] : memref<256x4xf32, #tpu.memory_space<vmem>>, vector<256x4xf32>
    %c0_1 = arith.constant 0 : index
    %c0_2 = arith.constant 0 : index
    %1 = vector.load %arg2[%c0_1, %c0_2] : memref<4x128xbf16, #tpu.memory_space<vmem>>, vector<4x128xbf16>
    %2 = arith.extf %1 : vector<4x128xbf16> to vector<4x128xf32>
    %c0_3 = arith.constant 0 : index
    %c0_4 = arith.constant 0 : index
    %3 = vector.load %arg3[%c0_3, %c0_4] : memref<1x128xf32, #tpu.memory_space<vmem>>, vector<1x128xf32>
    %4 = vector.extract_strided_slice %0 {offsets = [0, 0], sizes = [256, 1], strides = [1, 1]} : vector<256x4xf32> to vector<256x1xf32>
    %5 = vector.extract_strided_slice %2 {offsets = [0, 0], sizes = [1, 128], strides = [1, 1]} : vector<4x128xf32> to vector<1x128xf32>
    %6 = vector.broadcast %4 : vector<256x1xf32> to vector<256x128xf32>
    %7 = vector.broadcast %5 : vector<1x128xf32> to vector<256x128xf32>
    %8 = arith.mulf %6, %7 : vector<256x128xf32>
    %9 = vector.broadcast %3 : vector<1x128xf32> to vector<256x128xf32>
    %10 = arith.addf %9, %8 : vector<256x128xf32>
    %11 = vector.extract_strided_slice %0 {offsets = [0, 1], sizes = [256, 1], strides = [1, 1]} : vector<256x4xf32> to vector<256x1xf32>
    %12 = vector.extract_strided_slice %2 {offsets = [1, 0], sizes = [1, 128], strides = [1, 1]} : vector<4x128xf32> to vector<1x128xf32>
    %13 = vector.broadcast %11 : vector<256x1xf32> to vector<256x128xf32>
    %14 = vector.broadcast %12 : vector<1x128xf32> to vector<256x128xf32>
    %15 = arith.mulf %13, %14 : vector<256x128xf32>
    %16 = arith.addf %10, %15 : vector<256x128xf32>
    %17 = vector.extract_strided_slice %0 {offsets = [0, 2], sizes = [256, 1], strides = [1, 1]} : vector<256x4xf32> to vector<256x1xf32>
    %18 = vector.extract_strided_slice %2 {offsets = [2, 0], sizes = [1, 128], strides = [1, 1]} : vector<4x128xf32> to vector<1x128xf32>
    %19 = vector.broadcast %17 : vector<256x1xf32> to vector<256x128xf32>
    %20 = vector.broadcast %18 : vector<1x128xf32> to vector<256x128xf32>
    %21 = arith.mulf %19, %20 : vector<256x128xf32>
    %22 = arith.addf %16, %21 : vector<256x128xf32>
    %23 = vector.extract_strided_slice %0 {offsets = [0, 3], sizes = [256, 1], strides = [1, 1]} : vector<256x4xf32> to vector<256x1xf32>
    %24 = vector.extract_strided_slice %2 {offsets = [3, 0], sizes = [1, 128], strides = [1, 1]} : vector<4x128xf32> to vector<1x128xf32>
    %25 = vector.broadcast %23 : vector<256x1xf32> to vector<256x128xf32>
    %26 = vector.broadcast %24 : vector<1x128xf32> to vector<256x128xf32>
    %27 = arith.mulf %25, %26 : vector<256x128xf32>
    %28 = arith.addf %22, %27 : vector<256x128xf32>
    %cst = arith.constant 0.000000e+00 : f32
    %29 = vector.broadcast %cst : f32 to vector<256x128xf32>
    %30 = arith.maximumf %28, %29 : vector<256x128xf32>
    %31 = arith.truncf %30 : vector<256x128xf32> to vector<256x128xbf16>
    %c0_5 = arith.constant 0 : index
    %c0_6 = arith.constant 0 : index
    %32 = vector.load %arg4[%c0_5, %c0_6] : memref<128x128xbf16, #tpu.memory_space<vmem>>, vector<128x128xbf16>
    %cst_7 = arith.constant dense<0.000000e+00> : vector<256x128xf32>
    %33 = tpu.matmul %31, %32, %cst_7 {dimension_numbers = #tpu.dot_dimension_numbers<[1], [0], [0], [1], [0, 0, 1, 1], [], []>} : vector<256x128xbf16>, vector<128x128xbf16>, vector<256x128xf32> -> vector<256x128xf32>
    %c0_8 = arith.constant 0 : index
    %c0_9 = arith.constant 0 : index
    %34 = vector.load %arg5[%c0_8, %c0_9] : memref<1x128xf32, #tpu.memory_space<vmem>>, vector<1x128xf32>
    %35 = vector.broadcast %34 : vector<1x128xf32> to vector<256x128xf32>
    %36 = arith.addf %33, %35 : vector<256x128xf32>
    %c0_10 = arith.constant 0 : index
    %c0_11 = arith.constant 0 : index
    %37 = vector.load %arg6[%c0_10, %c0_11] : memref<256x128xf32, #tpu.memory_space<vmem>>, vector<256x128xf32>
    tpu.vector_store %arg6[%c0_10, %c0_11], %36 {strides = array<i32>} : memref<256x128xf32, #tpu.memory_space<vmem>>, vector<256x128xf32>,
    return
  }
  func.func @transform_0(%arg0: i32) -> (i32, i32) {
    %c0_i32 = arith.constant 0 : i32
    %c0_i32_0 = arith.constant 0 : i32
    return %arg0, %c0_i32 : i32, i32
  }
  func.func @transform_1(%arg0: i32) -> (i32, i32) {
    %c0_i32 = arith.constant 0 : i32
    %c0_i32_0 = arith.constant 0 : i32
    %c0_i32_1 = arith.constant 0 : i32
    return %c0_i32, %c0_i32_0 : i32, i32
  }
  func.func @transform_2(%arg0: i32) -> (i32, i32) {
    %c0_i32 = arith.constant 0 : i32
    %c0_i32_0 = arith.constant 0 : i32
    %c0_i32_1 = arith.constant 0 : i32
    return %c0_i32, %c0_i32_0 : i32, i32
  }
  func.func @transform_3(%arg0: i32) -> (i32, i32) {
    %c0_i32 = arith.constant 0 : i32
    %c0_i32_0 = arith.constant 0 : i32
    %c0_i32_1 = arith.constant 0 : i32
    return %c0_i32, %c0_i32_0 : i32, i32
  }
  func.func @transform_4(%arg0: i32) -> (i32, i32) {
    %c0_i32 = arith.constant 0 : i32
    %c0_i32_0 = arith.constant 0 : i32
    %c0_i32_1 = arith.constant 0 : i32
    return %c0_i32, %c0_i32_0 : i32, i32
  }
  func.func @transform_5(%arg0: i32) -> (i32, i32) {
    %c0_i32 = arith.constant 0 : i32
    %c0_i32_0 = arith.constant 0 : i32
    return %arg0, %c0_i32 : i32, i32
  }
}

</mosaic_0001>

<llo_original>
// kernel: _forward_padded.1
$region0: #{_forward_padded.1}
  #allocation0 [shape = 'u32[]', space=smem, size = 0x4, offset = 0x4, fixed_abs, tag = 'smem constant byte address 0x4 - core index']
  #allocation1 [shape = 'u32[144,128]{1,0:T(1,128)}', space=vmem, size = 0x12000, scoped, tag = 'internal scratch']
  %s0 = inlined_call_operand.vmem [shape: f32[512,4], index: 0, kind: input, shape index: {}]
  %s1 = inlined_call_operand.vmem [shape: bf16[4,128], index: 1, kind: input, shape index: {}]
  %s2 = inlined_call_operand.vmem [shape: f32[1,128], index: 2, kind: input, shape index: {}]
  %s3 = inlined_call_operand.vmem [shape: bf16[128,128], index: 3, kind: input, shape index: {}]
  %s4 = inlined_call_operand.vmem [shape: f32[1,128], index: 4, kind: input, shape index: {}]
  %s5 = inlined_call_operand.hbm [shape: f32[512,128], index: 5, kind: output, shape index: {}]
  %s6 = sld [smem:[#allocation0]]
  $region53: #{_forward_padded.1} parent=0
    _
  %s8 = ssub.s32 1, %s6
  %s9 = scalar_select 0, %s8, %s6
  $region1: #{_forward_padded.1} parent=0
    #allocation2 [shape = 'u8[262144]{0}', space=vmem, size = 0x40000, scoped, tag = 'output window, operand 0']
    #allocation3 [shape = 's32[2]{0}', space=sflag, size = 0x8, scoped, tag = 'scoped memory for _forward_padded.1']
    %10 = vsyncpa [#allocation3], 0
    %s11 = scalar_lea.sflag [#allocation3], 1
    %12 = vsyncpa %s11, 0
    loop: start=0, step=1, limit=4
    $region2: #{_forward_padded.1} parent=1 // loop_pre_header
      _
    $region3: #{_forward_padded.1} parent=1 // loop_header
      %s14 = sphi 0, %s18
      %p15 = scmp.ge.s32.totalorder %s14, 4
      %s24 = sphi 0, %s26
      %s27 = sphi 0, %s24
      %s28 = sphi 0, %s27
      %s44 = sphi 0, %s28
      %s48 = sphi 0, %s48
      %s50 = sphi 0, %s48
      %s51 = sphi 0, %s50
      %s65 = sphi 0, %s51
      %s69 = sphi 0, %s69
      %s71 = sphi 0, %s69
      %s72 = sphi 0, %s71
      %s86 = sphi 0, %s72
      %s90 = sphi 0, %s90
      %s92 = sphi 0, %s90
      %s93 = sphi 0, %s92
      %s107 = sphi 0, %s93
      %s111 = sphi 0, %s111
      %s113 = sphi 0, %s111
      %s114 = sphi 0, %s113
      %s128 = sphi 0, %s114
      %s134 = sphi 0, %s136
      %s137 = sphi 0, %s134
      %s138 = sphi 0, %s137
      %s154 = sphi 0, %s138
    $region4: #{_forward_padded.1} parent=1 // loop_header_branch
      %17 = sbr.rel (%p15) target = $region8
    $region5: #{_forward_padded.1} parent=1 // loop_body
      %s19 = ssub.s32 %s14, 1
      %s20 = ssub.s32 %s14, 2
      %s21 = sadd.s32 %s14, 1
      %s22 = ssub.s32 %s14, %s21
      %p23 = scmp.eq.s32.totalorder %s22, 0
      %s25 = sadd.s32 %s24, 1
      %s26 = scalar_select %p23, %s24, %s25
      %p29 = pneg %p23
      %p30 = scmp.eq.s32.totalorder %s14, 1
      %p31 = por %p29, %p30
      %p32 = scmp.ne.s32.totalorder %s24, %s27
      %p33 = scmp.eq.s32.totalorder %s14, 0
      %p34 = por %p32, %p33
      %p35 = scmp.ne.s32.totalorder %s24, %s27
      %p36 = scmp.eq.s32.totalorder %s19, 1
      %p37 = por %p35, %p36
      %p38 = scmp.ne.s32.totalorder %s27, %s28
      %p39 = scmp.eq.s32.totalorder %s19, 0
      %p40 = por %p38, %p39
      %p41 = scmp.ne.s32.totalorder %s27, %s28
      %p42 = scmp.eq.s32.totalorder %s20, 1
      %p43 = por %p41, %p42
      %p45 = scmp.ne.s32.totalorder %s28, %s44
      %p46 = scmp.eq.s32.totalorder %s20, 0
      %p47 = por %p45, %p46
      %s49 = sadd.s32 %s48, 1
      %p52 = scmp.eq.s32.totalorder %s14, 1
      %p53 = scmp.ne.s32.totalorder %s48, %s50
      %p54 = scmp.eq.s32.totalorder %s14, 0
      %p55 = por %p53, %p54
      %p56 = scmp.ne.s32.totalorder %s48, %s50
      %p57 = scmp.eq.s32.totalorder %s19, 1
      %p58 = por %p56, %p57
      %p59 = scmp.ne.s32.totalorder %s50, %s51
      %p60 = scmp.eq.s32.totalorder %s19, 0
      %p61 = por %p59, %p60
      %p62 = scmp.ne.s32.totalorder %s50, %s51
      %p63 = scmp.eq.s32.totalorder %s20, 1
      %p64 = por %p62, %p63
      %p66 = scmp.ne.s32.totalorder %s51, %s65
      %p67 = scmp.eq.s32.totalorder %s20, 0
      %p68 = por %p66, %p67
      %s70 = sadd.s32 %s69, 1
      %p73 = scmp.eq.s32.totalorder %s14, 1
      %p74 = scmp.ne.s32.totalorder %s69, %s71
      %p75 = scmp.eq.s32.totalorder %s14, 0
      %p76 = por %p74, %p75
      %p77 = scmp.ne.s32.totalorder %s69, %s71
      %p78 = scmp.eq.s32.totalorder %s19, 1
      %p79 = por %p77, %p78
      %p80 = scmp.ne.s32.totalorder %s71, %s72
      %p81 = scmp.eq.s32.totalorder %s19, 0
      %p82 = por %p80, %p81
      %p83 = scmp.ne.s32.totalorder %s71, %s72
      %p84 = scmp.eq.s32.totalorder %s20, 1
      %p85 = por %p83, %p84
      %p87 = scmp.ne.s32.totalorder %s72, %s86
      %p88 = scmp.eq.s32.totalorder %s20, 0
      %p89 = por %p87, %p88
      %s91 = sadd.s32 %s90, 1
      %p94 = scmp.eq.s32.totalorder %s14, 1
      %p95 = scmp.ne.s32.totalorder %s90, %s92
      %p96 = scmp.eq.s32.totalorder %s14, 0
      %p97 = por %p95, %p96
      %p98 = scmp.ne.s32.totalorder %s90, %s92
      %p99 = scmp.eq.s32.totalorder %s19, 1
      %p100 = por %p98, %p99
      %p101 = scmp.ne.s32.totalorder %s92, %s93
      %p102 = scmp.eq.s32.totalorder %s19, 0
      %p103 = por %p101, %p102
      %p104 = scmp.ne.s32.totalorder %s92, %s93
      %p105 = scmp.eq.s32.totalorder %s20, 1
      %p106 = por %p104, %p105
      %p108 = scmp.ne.s32.totalorder %s93, %s107
      %p109 = scmp.eq.s32.totalorder %s20, 0
      %p110 = por %p108, %p109
      %s112 = sadd.s32 %s111, 1
      %p115 = scmp.eq.s32.totalorder %s14, 1
      %p116 = scmp.ne.s32.totalorder %s111, %s113
      %p117 = scmp.eq.s32.totalorder %s14, 0
      %p118 = por %p116, %p117
      %p119 = scmp.ne.s32.totalorder %s111, %s113
      %p120 = scmp.eq.s32.totalorder %s19, 1
      %p121 = por %p119, %p120
      %p122 = scmp.ne.s32.totalorder %s113, %s114
      %p123 = scmp.eq.s32.totalorder %s19, 0
      %p124 = por %p122, %p123
      %p125 = scmp.ne.s32.totalorder %s113, %s114
      %p126 = scmp.eq.s32.totalorder %s20, 1
      %p127 = por %p125, %p126
      %p129 = scmp.ne.s32.totalorder %s114, %s128
      %p130 = scmp.eq.s32.totalorder %s20, 0
      %p131 = por %p129, %p130
      %s132 = ssub.s32 %s14, %s21
      %p133 = scmp.eq.s32.totalorder %s132, 0
      %s135 = sadd.s32 %s134, 1
      %s136 = scalar_select %p133, %s134, %s135
      %p139 = pneg %p133
      %p140 = scmp.eq.s32.totalorder %s14, 1
      %p141 = por %p139, %p140
      %p142 = scmp.ne.s32.totalorder %s134, %s137
      %p143 = scmp.eq.s32.totalorder %s14, 0
      %p144 = por %p142, %p143
      %p145 = scmp.ne.s32.totalorder %s134, %s137
      %p146 = scmp.eq.s32.totalorder %s19, 1
      %p147 = por %p145, %p146
      %p148 = scmp.ne.s32.totalorder %s137, %s138
      %p149 = scmp.eq.s32.totalorder %s19, 0
      %p150 = por %p148, %p149
      %p151 = scmp.ne.s32.totalorder %s137, %s138
      %p152 = scmp.eq.s32.totalorder %s20, 1
      %p153 = por %p151, %p152
      %p155 = scmp.ne.s32.totalorder %s138, %s154
      %p156 = scmp.eq.s32.totalorder %s20, 0
      %p157 = por %p155, %p156
      %p158 = scmp.le.s32.totalorder 1, %s14
      %p159 = scmp.lt.s32.totalorder %s14, 3
      %p160 = pnand %p158, %p159
      %p161 = pneg %p160
      // Predicated region
      $region9: #{_forward_padded.1} parent=5 // pred_check
        _
      $region10: #{_forward_padded.1} parent=5 // pred_check_branch
        %163 = sbr.rel (%p160) target = $region12
      $region11: #{_forward_padded.1} parent=5 // pred_region
        %s164 = ssub.s32 %s14, 1
        // Predicated region
        $region13: #{_forward_padded.1} parent=11 // pred_check
          %p165 = pneg %p61
        $region14: #{_forward_padded.1} parent=11 // pred_check_branch
          %167 = sbr.rel (%p165) target = $region16
        $region15: #{_forward_padded.1} parent=11 // pred_region
          _
        $region16: #{_forward_padded.1} parent=11 // pred_fallthru
          _
        // Predicated region
        $region17: #{_forward_padded.1} parent=11 // pred_check
          %p168 = pneg %p82
        $region18: #{_forward_padded.1} parent=11 // pred_check_branch
          %170 = sbr.rel (%p168) target = $region20
        $region19: #{_forward_padded.1} parent=11 // pred_region
          _
        $region20: #{_forward_padded.1} parent=11 // pred_fallthru
          _
        // Predicated region
        $region21: #{_forward_padded.1} parent=11 // pred_check
          %p171 = pneg %p103
        $region22: #{_forward_padded.1} parent=11 // pred_check_branch
          %173 = sbr.rel (%p171) target = $region24
        $region23: #{_forward_padded.1} parent=11 // pred_region
          _
        $region24: #{_forward_padded.1} parent=11 // pred_fallthru
          _
        // Predicated region
        $region25: #{_forward_padded.1} parent=11 // pred_check
          %p174 = pneg %p124
        $region26: #{_forward_padded.1} parent=11 // pred_check_branch
          %176 = sbr.rel (%p174) target = $region28
        $region27: #{_forward_padded.1} parent=11 // pred_region
          _
        $region28: #{_forward_padded.1} parent=11 // pred_fallthru
          _
      $region12: #{_forward_padded.1} parent=5 // pred_fallthru
        _
      %p177 = scmp.lt.s32.totalorder %s14, 2
      // Predicated region
      $region29: #{_forward_padded.1} parent=5 // pred_check
        %p178 = pneg %p177
      $region30: #{_forward_padded.1} parent=5 // pred_check_branch
        %180 = sbr.rel (%p178) target = $region32
      $region31: #{_forward_padded.1} parent=5 // pred_region
        // Predicated region
        $region33: #{_forward_padded.1} parent=31 // pred_check
          %p181 = pneg %p34
        $region34: #{_forward_padded.1} parent=31 // pred_check_branch
          %183 = sbr.rel (%p181) target = $region36
        $region35: #{_forward_padded.1} parent=31 // pred_region
          %s184 = smul.u32 32, %s14
          %p185 = scmp.lt.s32.totalorder %s184, 63
          %s186 = scalar_select %p185, %s184, 63
          %s187 = smul.addr %s186, 8
          %s188 = scalar_lea.vmem %s0, %s187
          %s189 = smul.u32 32, %s14
        $region36: #{_forward_padded.1} parent=31 // pred_fallthru
          _
      $region32: #{_forward_padded.1} parent=5 // pred_fallthru
        _
      %p190 = scmp.le.s32.totalorder 1, %s14
      %p191 = scmp.lt.s32.totalorder %s14, 3
      %p192 = pnand %p190, %p191
      %p193 = pneg %p192
      // Predicated region
      $region37: #{_forward_padded.1} parent=5 // pred_check
        _
      $region38: #{_forward_padded.1} parent=5 // pred_check_branch
        %195 = sbr.rel (%p192) target = $region40
      $region39: #{_forward_padded.1} parent=5 // pred_region
        %s196 = ssub.s32 %s14, 1
        %s197 = smul.u32 32, %s19
        %p198 = scmp.lt.s32.totalorder %s197, 63
        %s199 = scalar_select %p198, %s197, 63
        %s200 = smul.addr %s199, 8
        %s201 = scalar_lea.vmem %s0, %s200
        %p202 = pneg %p40
        %p203 = pneg %p37
        %p204 = pneg %p61
        %p205 = pneg %p58
        %p206 = pneg %p82
        %p207 = pneg %p79
        %p208 = pneg %p103
        %p209 = pneg %p100
        %p210 = pneg %p124
        %p211 = pneg %p121
        %p212 = pneg %p150
        %p213 = pneg %p147
        %s214 = sand.u32 %s137, 1
        %s215 = scalar_lea.sflag [#allocation3], %s214
        %s216 = sand.u32 %s137, 1
        %s217 = smul.addr %s216, 256
        %s218 = scalar_lea.vmem [#allocation2], %s217
        %s219 = smul.u32 32, %s19
        %p220 = scmp.lt.s32.totalorder %s219, 63
        %s221 = scalar_select %p220, %s219, 63
        %s222 = smul.addr %s221, 8
        %s223 = scalar_lea.vmem %s0, %s222
        %s224 = smul.u32 32, %s19
        %s225 = smul.u32 32, %s19
        %v227 = vld [vmem:[%s223] sm:$0xff]
        %v228 = vld [vmem:[%s223 + $0x8] sm:$0xff]
        %v229 = vld [vmem:[%s223 + $0x10] sm:$0xff]
        %v230 = vld [vmem:[%s223 + $0x18] sm:$0xff]
        %v231 = vld [vmem:[%s223 + $0x20] sm:$0xff]
        %v232 = vld [vmem:[%s223 + $0x28] sm:$0xff]
        %v233 = vld [vmem:[%s223 + $0x30] sm:$0xff]
        %v234 = vld [vmem:[%s223 + $0x38] sm:$0xff]
        %v235 = vld [vmem:[%s223 + $0x40] sm:$0xff]
        %v236 = vld [vmem:[%s223 + $0x48] sm:$0xff]
        %v237 = vld [vmem:[%s223 + $0x50] sm:$0xff]
        %v238 = vld [vmem:[%s223 + $0x58] sm:$0xff]
        %v239 = vld [vmem:[%s223 + $0x60] sm:$0xff]
        %v240 = vld [vmem:[%s223 + $0x68] sm:$0xff]
        %v241 = vld [vmem:[%s223 + $0x70] sm:$0xff]
        %v242 = vld [vmem:[%s223 + $0x78] sm:$0xff]
        %v243 = vld [vmem:[%s223 + $0x80] sm:$0xff]
        %v244 = vld [vmem:[%s223 + $0x88] sm:$0xff]
        %v245 = vld [vmem:[%s223 + $0x90] sm:$0xff]
        %v246 = vld [vmem:[%s223 + $0x98] sm:$0xff]
        %v247 = vld [vmem:[%s223 + $0xa0] sm:$0xff]
        %v248 = vld [vmem:[%s223 + $0xa8] sm:$0xff]
        %v249 = vld [vmem:[%s223 + $0xb0] sm:$0xff]
        %v250 = vld [vmem:[%s223 + $0xb8] sm:$0xff]
        %v251 = vld [vmem:[%s223 + $0xc0] sm:$0xff]
        %v252 = vld [vmem:[%s223 + $0xc8] sm:$0xff]
        %v253 = vld [vmem:[%s223 + $0xd0] sm:$0xff]
        %v254 = vld [vmem:[%s223 + $0xd8] sm:$0xff]
        %v255 = vld [vmem:[%s223 + $0xe0] sm:$0xff]
        %v256 = vld [vmem:[%s223 + $0xe8] sm:$0xff]
        %v257 = vld [vmem:[%s223 + $0xf0] sm:$0xff]
        %v258 = vld [vmem:[%s223 + $0xf8] sm:$0xff]
        %v259 = vld [vmem:[%s1] sm:$0x3]
        %v260 = vunpack.c.l.bf16 %v259
        %v261 = vld [vmem:[%s2] sm:$0x1]
        %263 = vset.pattern.permute.xlu0 0
        %264 = vperm.xlu0 %263, %v227
        %v265 = vpop.permute.xlu0 %264
        %268 = vset.pattern.permute.xlu0 0
        %269 = vperm.xlu0 %268, %v228
        %v270 = vpop.permute.xlu0 %269
        %273 = vset.pattern.permute.xlu0 0
        %274 = vperm.xlu0 %273, %v229
        %v275 = vpop.permute.xlu0 %274
        %278 = vset.pattern.permute.xlu0 0
        %279 = vperm.xlu0 %278, %v230
        %v280 = vpop.permute.xlu0 %279
        %283 = vset.pattern.permute.xlu0 0
        %284 = vperm.xlu0 %283, %v231
        %v285 = vpop.permute.xlu0 %284
        %288 = vset.pattern.permute.xlu0 0
        %289 = vperm.xlu0 %288, %v232
        %v290 = vpop.permute.xlu0 %289
        %293 = vset.pattern.permute.xlu0 0
        %294 = vperm.xlu0 %293, %v233
        %v295 = vpop.permute.xlu0 %294
        %298 = vset.pattern.permute.xlu0 0
        %299 = vperm.xlu0 %298, %v234
        %v300 = vpop.permute.xlu0 %299
        %303 = vset.pattern.permute.xlu0 0
        %304 = vperm.xlu0 %303, %v235
        %v305 = vpop.permute.xlu0 %304
        %308 = vset.pattern.permute.xlu0 0
        %309 = vperm.xlu0 %308, %v236
        %v310 = vpop.permute.xlu0 %309
        %313 = vset.pattern.permute.xlu0 0
        %314 = vperm.xlu0 %313, %v237
        %v315 = vpop.permute.xlu0 %314
        %318 = vset.pattern.permute.xlu0 0
        %319 = vperm.xlu0 %318, %v238
        %v320 = vpop.permute.xlu0 %319
        %323 = vset.pattern.permute.xlu0 0
        %324 = vperm.xlu0 %323, %v239
        %v325 = vpop.permute.xlu0 %324
        %328 = vset.pattern.permute.xlu0 0
        %329 = vperm.xlu0 %328, %v240
        %v330 = vpop.permute.xlu0 %329
        %333 = vset.pattern.permute.xlu0 0
        %334 = vperm.xlu0 %333, %v241
        %v335 = vpop.permute.xlu0 %334
        %338 = vset.pattern.permute.xlu0 0
        %339 = vperm.xlu0 %338, %v242
        %v340 = vpop.permute.xlu0 %339
        %343 = vset.pattern.permute.xlu0 0
        %344 = vperm.xlu0 %343, %v243
        %v345 = vpop.permute.xlu0 %344
        %348 = vset.pattern.permute.xlu0 0
        %349 = vperm.xlu0 %348, %v244
        %v350 = vpop.permute.xlu0 %349
        %353 = vset.pattern.permute.xlu0 0
        %354 = vperm.xlu0 %353, %v245
        %v355 = vpop.permute.xlu0 %354
        %358 = vset.pattern.permute.xlu0 0
        %359 = vperm.xlu0 %358, %v246
        %v360 = vpop.permute.xlu0 %359
        %363 = vset.pattern.permute.xlu0 0
        %364 = vperm.xlu0 %363, %v247
        %v365 = vpop.permute.xlu0 %364
        %368 = vset.pattern.permute.xlu0 0
        %369 = vperm.xlu0 %368, %v248
        %v370 = vpop.permute.xlu0 %369
        %373 = vset.pattern.permute.xlu0 0
        %374 = vperm.xlu0 %373, %v249
        %v375 = vpop.permute.xlu0 %374
        %378 = vset.pattern.permute.xlu0 0
        %379 = vperm.xlu0 %378, %v250
        %v380 = vpop.permute.xlu0 %379
        %383 = vset.pattern.permute.xlu0 0
        %384 = vperm.xlu0 %383, %v251
        %v385 = vpop.permute.xlu0 %384
        %388 = vset.pattern.permute.xlu0 0
        %389 = vperm.xlu0 %388, %v252
        %v390 = vpop.permute.xlu0 %389
        %393 = vset.pattern.permute.xlu0 0
        %394 = vperm.xlu0 %393, %v253
        %v395 = vpop.permute.xlu0 %394
        %398 = vset.pattern.permute.xlu0 0
        %399 = vperm.xlu0 %398, %v254
        %v400 = vpop.permute.xlu0 %399
        %403 = vset.pattern.permute.xlu0 0
        %404 = vperm.xlu0 %403, %v255
        %v405 = vpop.permute.xlu0 %404
        %408 = vset.pattern.permute.xlu0 0
        %409 = vperm.xlu0 %408, %v256
        %v410 = vpop.permute.xlu0 %409
        %413 = vset.pattern.permute.xlu0 0
        %414 = vperm.xlu0 %413, %v257
        %v415 = vpop.permute.xlu0 %414
        %418 = vset.pattern.permute.xlu0 0
        %419 = vperm.xlu0 %418, %v258
        %v420 = vpop.permute.xlu0 %419
        %v422 = vlaneseq
        %v423 = vshrl.u32 %v422, 7
        %v424 = vsub.s32 0, %v423
        %v425 = vrot.slane %v260, %v424
        %v426 = vmul.f32 %v265, %v425
        %v427 = vmul.f32 %v270, %v425
        %v428 = vmul.f32 %v275, %v425
        %v429 = vmul.f32 %v280, %v425
        %v430 = vmul.f32 %v285, %v425
        %v431 = vmul.f32 %v290, %v425
        %v432 = vmul.f32 %v295, %v425
        %v433 = vmul.f32 %v300, %v425
        %v434 = vmul.f32 %v305, %v425
        %v435 = vmul.f32 %v310, %v425
        %v436 = vmul.f32 %v315, %v425
        %v437 = vmul.f32 %v320, %v425
        %v438 = vmul.f32 %v325, %v425
        %v439 = vmul.f32 %v330, %v425
        %v440 = vmul.f32 %v335, %v425
        %v441 = vmul.f32 %v340, %v425
        %v442 = vmul.f32 %v345, %v425
        %v443 = vmul.f32 %v350, %v425
        %v444 = vmul.f32 %v355, %v425
        %v445 = vmul.f32 %v360, %v425
        %v446 = vmul.f32 %v365, %v425
        %v447 = vmul.f32 %v370, %v425
        %v448 = vmul.f32 %v375, %v425
        %v449 = vmul.f32 %v380, %v425
        %v450 = vmul.f32 %v385, %v425
        %v451 = vmul.f32 %v390, %v425
        %v452 = vmul.f32 %v395, %v425
        %v453 = vmul.f32 %v400, %v425
        %v454 = vmul.f32 %v405, %v425
        %v455 = vmul.f32 %v410, %v425
        %v456 = vmul.f32 %v415, %v425
        %v457 = vmul.f32 %v420, %v425
        %v459 = vlaneseq
        %v460 = vshrl.u32 %v459, 7
        %v461 = vsub.s32 0, %v460
        %v462 = vrot.slane %v261, %v461
        %v464 = vadd.f32 %v462, %v426
        %v465 = vadd.f32 %v462, %v427
        %v466 = vadd.f32 %v462, %v428
        %v467 = vadd.f32 %v462, %v429
        %v468 = vadd.f32 %v462, %v430
        %v469 = vadd.f32 %v462, %v431
        %v470 = vadd.f32 %v462, %v432
        %v471 = vadd.f32 %v462, %v433
        %v472 = vadd.f32 %v462, %v434
        %v473 = vadd.f32 %v462, %v435
        %v474 = vadd.f32 %v462, %v436
        %v475 = vadd.f32 %v462, %v437
        %v476 = vadd.f32 %v462, %v438
        %v477 = vadd.f32 %v462, %v439
        %v478 = vadd.f32 %v462, %v440
        %v479 = vadd.f32 %v462, %v441
        %v480 = vadd.f32 %v462, %v442
        %v481 = vadd.f32 %v462, %v443
        %v482 = vadd.f32 %v462, %v444
        %v483 = vadd.f32 %v462, %v445
        %v484 = vadd.f32 %v462, %v446
        %v485 = vadd.f32 %v462, %v447
        %v486 = vadd.f32 %v462, %v448
        %v487 = vadd.f32 %v462, %v449
        %v488 = vadd.f32 %v462, %v450
        %v489 = vadd.f32 %v462, %v451
        %v490 = vadd.f32 %v462, %v452
        %v491 = vadd.f32 %v462, %v453
        %v492 = vadd.f32 %v462, %v454
        %v493 = vadd.f32 %v462, %v455
        %v494 = vadd.f32 %v462, %v456
        %v495 = vadd.f32 %v462, %v457
        %496 = vset.pattern.permute.xlu0 1
        %497 = vperm.xlu0 %496, %v227
        %v498 = vpop.permute.xlu0 %497
        %500 = vset.pattern.permute.xlu0 1
        %501 = vperm.xlu0 %500, %v228
        %v502 = vpop.permute.xlu0 %501
        %504 = vset.pattern.permute.xlu0 1
        %505 = vperm.xlu0 %504, %v229
        %v506 = vpop.permute.xlu0 %505
        %508 = vset.pattern.permute.xlu0 1
        %509 = vperm.xlu0 %508, %v230
        %v510 = vpop.permute.xlu0 %509
        %512 = vset.pattern.permute.xlu0 1
        %513 = vperm.xlu0 %512, %v231
        %v514 = vpop.permute.xlu0 %513
        %516 = vset.pattern.permute.xlu0 1
        %517 = vperm.xlu0 %516, %v232
        %v518 = vpop.permute.xlu0 %517
        %520 = vset.pattern.permute.xlu0 1
        %521 = vperm.xlu0 %520, %v233
        %v522 = vpop.permute.xlu0 %521
        %524 = vset.pattern.permute.xlu0 1
        %525 = vperm.xlu0 %524, %v234
        %v526 = vpop.permute.xlu0 %525
        %528 = vset.pattern.permute.xlu0 1
        %529 = vperm.xlu0 %528, %v235
        %v530 = vpop.permute.xlu0 %529
        %532 = vset.pattern.permute.xlu0 1
        %533 = vperm.xlu0 %532, %v236
        %v534 = vpop.permute.xlu0 %533
        %536 = vset.pattern.permute.xlu0 1
        %537 = vperm.xlu0 %536, %v237
        %v538 = vpop.permute.xlu0 %537
        %540 = vset.pattern.permute.xlu0 1
        %541 = vperm.xlu0 %540, %v238
        %v542 = vpop.permute.xlu0 %541
        %544 = vset.pattern.permute.xlu0 1
        %545 = vperm.xlu0 %544, %v239
        %v546 = vpop.permute.xlu0 %545
        %548 = vset.pattern.permute.xlu0 1
        %549 = vperm.xlu0 %548, %v240
        %v550 = vpop.permute.xlu0 %549
        %552 = vset.pattern.permute.xlu0 1
        %553 = vperm.xlu0 %552, %v241
        %v554 = vpop.permute.xlu0 %553
        %556 = vset.pattern.permute.xlu0 1
        %557 = vperm.xlu0 %556, %v242
        %v558 = vpop.permute.xlu0 %557
        %560 = vset.pattern.permute.xlu0 1
        %561 = vperm.xlu0 %560, %v243
        %v562 = vpop.permute.xlu0 %561
        %564 = vset.pattern.permute.xlu0 1
        %565 = vperm.xlu0 %564, %v244
        %v566 = vpop.permute.xlu0 %565
        %568 = vset.pattern.permute.xlu0 1
        %569 = vperm.xlu0 %568, %v245
        %v570 = vpop.permute.xlu0 %569
        %572 = vset.pattern.permute.xlu0 1
        %573 = vperm.xlu0 %572, %v246
        %v574 = vpop.permute.xlu0 %573
        %576 = vset.pattern.permute.xlu0 1
        %577 = vperm.xlu0 %576, %v247
        %v578 = vpop.permute.xlu0 %577
        %580 = vset.pattern.permute.xlu0 1
        %581 = vperm.xlu0 %580, %v248
        %v582 = vpop.permute.xlu0 %581
        %584 = vset.pattern.permute.xlu0 1
        %585 = vperm.xlu0 %584, %v249
        %v586 = vpop.permute.xlu0 %585
        %588 = vset.pattern.permute.xlu0 1
        %589 = vperm.xlu0 %588, %v250
        %v590 = vpop.permute.xlu0 %589
        %592 = vset.pattern.permute.xlu0 1
        %593 = vperm.xlu0 %592, %v251
        %v594 = vpop.permute.xlu0 %593
        %596 = vset.pattern.permute.xlu0 1
        %597 = vperm.xlu0 %596, %v252
        %v598 = vpop.permute.xlu0 %597
        %600 = vset.pattern.permute.xlu0 1
        %601 = vperm.xlu0 %600, %v253
        %v602 = vpop.permute.xlu0 %601
        %604 = vset.pattern.permute.xlu0 1
        %605 = vperm.xlu0 %604, %v254
        %v606 = vpop.permute.xlu0 %605
        %608 = vset.pattern.permute.xlu0 1
        %609 = vperm.xlu0 %608, %v255
        %v610 = vpop.permute.xlu0 %609
        %612 = vset.pattern.permute.xlu0 1
        %613 = vperm.xlu0 %612, %v256
        %v614 = vpop.permute.xlu0 %613
        %616 = vset.pattern.permute.xlu0 1
        %617 = vperm.xlu0 %616, %v257
        %v618 = vpop.permute.xlu0 %617
        %620 = vset.pattern.permute.xlu0 1
        %621 = vperm.xlu0 %620, %v258
        %v622 = vpop.permute.xlu0 %621
        %v624 = vlaneseq
        %v625 = vshrl.u32 %v624, 7
        %v626 = vsub.s32 1, %v625
        %v627 = vrot.slane %v260, %v626
        %v628 = vmul.f32 %v498, %v627
        %v629 = vmul.f32 %v502, %v627
        %v630 = vmul.f32 %v506, %v627
        %v631 = vmul.f32 %v510, %v627
        %v632 = vmul.f32 %v514, %v627
        %v633 = vmul.f32 %v518, %v627
        %v634 = vmul.f32 %v522, %v627
        %v635 = vmul.f32 %v526, %v627
        %v636 = vmul.f32 %v530, %v627
        %v637 = vmul.f32 %v534, %v627
        %v638 = vmul.f32 %v538, %v627
        %v639 = vmul.f32 %v542, %v627
        %v640 = vmul.f32 %v546, %v627
        %v641 = vmul.f32 %v550, %v627
        %v642 = vmul.f32 %v554, %v627
        %v643 = vmul.f32 %v558, %v627
        %v644 = vmul.f32 %v562, %v627
        %v645 = vmul.f32 %v566, %v627
        %v646 = vmul.f32 %v570, %v627
        %v647 = vmul.f32 %v574, %v627
        %v648 = vmul.f32 %v578, %v627
        %v649 = vmul.f32 %v582, %v627
        %v650 = vmul.f32 %v586, %v627
        %v651 = vmul.f32 %v590, %v627
        %v652 = vmul.f32 %v594, %v627
        %v653 = vmul.f32 %v598, %v627
        %v654 = vmul.f32 %v602, %v627
        %v655 = vmul.f32 %v606, %v627
        %v656 = vmul.f32 %v610, %v627
        %v657 = vmul.f32 %v614, %v627
        %v658 = vmul.f32 %v618, %v627
        %v659 = vmul.f32 %v622, %v627
        %v660 = vadd.f32 %v464, %v628
        %v661 = vadd.f32 %v465, %v629
        %v662 = vadd.f32 %v466, %v630
        %v663 = vadd.f32 %v467, %v631
        %v664 = vadd.f32 %v468, %v632
        %v665 = vadd.f32 %v469, %v633
        %v666 = vadd.f32 %v470, %v634
        %v667 = vadd.f32 %v471, %v635
        %v668 = vadd.f32 %v472, %v636
        %v669 = vadd.f32 %v473, %v637
        %v670 = vadd.f32 %v474, %v638
        %v671 = vadd.f32 %v475, %v639
        %v672 = vadd.f32 %v476, %v640
        %v673 = vadd.f32 %v477, %v641
        %v674 = vadd.f32 %v478, %v642
        %v675 = vadd.f32 %v479, %v643
        %v676 = vadd.f32 %v480, %v644
        %v677 = vadd.f32 %v481, %v645
        %v678 = vadd.f32 %v482, %v646
        %v679 = vadd.f32 %v483, %v647
        %v680 = vadd.f32 %v484, %v648
        %v681 = vadd.f32 %v485, %v649
        %v682 = vadd.f32 %v486, %v650
        %v683 = vadd.f32 %v487, %v651
        %v684 = vadd.f32 %v488, %v652
        %v685 = vadd.f32 %v489, %v653
        %v686 = vadd.f32 %v490, %v654
        %v687 = vadd.f32 %v491, %v655
        %v688 = vadd.f32 %v492, %v656
        %v689 = vadd.f32 %v493, %v657
        %v690 = vadd.f32 %v494, %v658
        %v691 = vadd.f32 %v495, %v659
        %692 = vset.pattern.permute.xlu0 2
        %693 = vperm.xlu0 %692, %v227
        %v694 = vpop.permute.xlu0 %693
        %696 = vset.pattern.permute.xlu0 2
        %697 = vperm.xlu0 %696, %v228
        %v698 = vpop.permute.xlu0 %697
        %700 = vset.pattern.permute.xlu0 2
        %701 = vperm.xlu0 %700, %v229
        %v702 = vpop.permute.xlu0 %701
        %704 = vset.pattern.permute.xlu0 2
        %705 = vperm.xlu0 %704, %v230
        %v706 = vpop.permute.xlu0 %705
        %708 = vset.pattern.permute.xlu0 2
        %709 = vperm.xlu0 %708, %v231
        %v710 = vpop.permute.xlu0 %709
        %712 = vset.pattern.permute.xlu0 2
        %713 = vperm.xlu0 %712, %v232
        %v714 = vpop.permute.xlu0 %713
        %716 = vset.pattern.permute.xlu0 2
        %717 = vperm.xlu0 %716, %v233
        %v718 = vpop.permute.xlu0 %717
        %720 = vset.pattern.permute.xlu0 2
        %721 = vperm.xlu0 %720, %v234
        %v722 = vpop.permute.xlu0 %721
        %724 = vset.pattern.permute.xlu0 2
        %725 = vperm.xlu0 %724, %v235
        %v726 = vpop.permute.xlu0 %725
        %728 = vset.pattern.permute.xlu0 2
        %729 = vperm.xlu0 %728, %v236
        %v730 = vpop.permute.xlu0 %729
        %732 = vset.pattern.permute.xlu0 2
        %733 = vperm.xlu0 %732, %v237
        %v734 = vpop.permute.xlu0 %733
        %736 = vset.pattern.permute.xlu0 2
        %737 = vperm.xlu0 %736, %v238
        %v738 = vpop.permute.xlu0 %737
        %740 = vset.pattern.permute.xlu0 2
        %741 = vperm.xlu0 %740, %v239
        %v742 = vpop.permute.xlu0 %741
        %744 = vset.pattern.permute.xlu0 2
        %745 = vperm.xlu0 %744, %v240
        %v746 = vpop.permute.xlu0 %745
        %748 = vset.pattern.permute.xlu0 2
        %749 = vperm.xlu0 %748, %v241
        %v750 = vpop.permute.xlu0 %749
        %752 = vset.pattern.permute.xlu0 2
        %753 = vperm.xlu0 %752, %v242
        %v754 = vpop.permute.xlu0 %753
        %756 = vset.pattern.permute.xlu0 2
        %757 = vperm.xlu0 %756, %v243
        %v758 = vpop.permute.xlu0 %757
        %760 = vset.pattern.permute.xlu0 2
        %761 = vperm.xlu0 %760, %v244
        %v762 = vpop.permute.xlu0 %761
        %764 = vset.pattern.permute.xlu0 2
        %765 = vperm.xlu0 %764, %v245
        %v766 = vpop.permute.xlu0 %765
        %768 = vset.pattern.permute.xlu0 2
        %769 = vperm.xlu0 %768, %v246
        %v770 = vpop.permute.xlu0 %769
        %772 = vset.pattern.permute.xlu0 2
        %773 = vperm.xlu0 %772, %v247
        %v774 = vpop.permute.xlu0 %773
        %776 = vset.pattern.permute.xlu0 2
        %777 = vperm.xlu0 %776, %v248
        %v778 = vpop.permute.xlu0 %777
        %780 = vset.pattern.permute.xlu0 2
        %781 = vperm.xlu0 %780, %v249
        %v782 = vpop.permute.xlu0 %781
        %784 = vset.pattern.permute.xlu0 2
        %785 = vperm.xlu0 %784, %v250
        %v786 = vpop.permute.xlu0 %785
        %788 = vset.pattern.permute.xlu0 2
        %789 = vperm.xlu0 %788, %v251
        %v790 = vpop.permute.xlu0 %789
        %792 = vset.pattern.permute.xlu0 2
        %793 = vperm.xlu0 %792, %v252
        %v794 = vpop.permute.xlu0 %793
        %796 = vset.pattern.permute.xlu0 2
        %797 = vperm.xlu0 %796, %v253
        %v798 = vpop.permute.xlu0 %797
        %800 = vset.pattern.permute.xlu0 2
        %801 = vperm.xlu0 %800, %v254
        %v802 = vpop.permute.xlu0 %801
        %804 = vset.pattern.permute.xlu0 2
        %805 = vperm.xlu0 %804, %v255
        %v806 = vpop.permute.xlu0 %805
        %808 = vset.pattern.permute.xlu0 2
        %809 = vperm.xlu0 %808, %v256
        %v810 = vpop.permute.xlu0 %809
        %812 = vset.pattern.permute.xlu0 2
        %813 = vperm.xlu0 %812, %v257
        %v814 = vpop.permute.xlu0 %813
        %816 = vset.pattern.permute.xlu0 2
        %817 = vperm.xlu0 %816, %v258
        %v818 = vpop.permute.xlu0 %817
        %v820 = vlaneseq
        %v821 = vshrl.u32 %v820, 7
        %v822 = vsub.s32 2, %v821
        %v823 = vrot.slane %v260, %v822
        %v824 = vmul.f32 %v694, %v823
        %v825 = vmul.f32 %v698, %v823
        %v826 = vmul.f32 %v702, %v823
        %v827 = vmul.f32 %v706, %v823
        %v828 = vmul.f32 %v710, %v823
        %v829 = vmul.f32 %v714, %v823
        %v830 = vmul.f32 %v718, %v823
        %v831 = vmul.f32 %v722, %v823
        %v832 = vmul.f32 %v726, %v823
        %v833 = vmul.f32 %v730, %v823
        %v834 = vmul.f32 %v734, %v823
        %v835 = vmul.f32 %v738, %v823
        %v836 = vmul.f32 %v742, %v823
        %v837 = vmul.f32 %v746, %v823
        %v838 = vmul.f32 %v750, %v823
        %v839 = vmul.f32 %v754, %v823
        %v840 = vmul.f32 %v758, %v823
        %v841 = vmul.f32 %v762, %v823
        %v842 = vmul.f32 %v766, %v823
        %v843 = vmul.f32 %v770, %v823
        %v844 = vmul.f32 %v774, %v823
        %v845 = vmul.f32 %v778, %v823
        %v846 = vmul.f32 %v782, %v823
        %v847 = vmul.f32 %v786, %v823
        %v848 = vmul.f32 %v790, %v823
        %v849 = vmul.f32 %v794, %v823
        %v850 = vmul.f32 %v798, %v823
        %v851 = vmul.f32 %v802, %v823
        %v852 = vmul.f32 %v806, %v823
        %v853 = vmul.f32 %v810, %v823
        %v854 = vmul.f32 %v814, %v823
        %v855 = vmul.f32 %v818, %v823
        %v856 = vadd.f32 %v660, %v824
        %v857 = vadd.f32 %v661, %v825
        %v858 = vadd.f32 %v662, %v826
        %v859 = vadd.f32 %v663, %v827
        %v860 = vadd.f32 %v664, %v828
        %v861 = vadd.f32 %v665, %v829
        %v862 = vadd.f32 %v666, %v830
        %v863 = vadd.f32 %v667, %v831
        %v864 = vadd.f32 %v668, %v832
        %v865 = vadd.f32 %v669, %v833
        %v866 = vadd.f32 %v670, %v834
        %v867 = vadd.f32 %v671, %v835
        %v868 = vadd.f32 %v672, %v836
        %v869 = vadd.f32 %v673, %v837
        %v870 = vadd.f32 %v674, %v838
        %v871 = vadd.f32 %v675, %v839
        %v872 = vadd.f32 %v676, %v840
        %v873 = vadd.f32 %v677, %v841
        %v874 = vadd.f32 %v678, %v842
        %v875 = vadd.f32 %v679, %v843
        %v876 = vadd.f32 %v680, %v844
        %v877 = vadd.f32 %v681, %v845
        %v878 = vadd.f32 %v682, %v846
        %v879 = vadd.f32 %v683, %v847
        %v880 = vadd.f32 %v684, %v848
        %v881 = vadd.f32 %v685, %v849
        %v882 = vadd.f32 %v686, %v850
        %v883 = vadd.f32 %v687, %v851
        %v884 = vadd.f32 %v688, %v852
        %v885 = vadd.f32 %v689, %v853
        %v886 = vadd.f32 %v690, %v854
        %v887 = vadd.f32 %v691, %v855
        %888 = vset.pattern.permute.xlu0 3
        %889 = vperm.xlu0 %888, %v227
        %v890 = vpop.permute.xlu0 %889
        %892 = vset.pattern.permute.xlu0 3
        %893 = vperm.xlu0 %892, %v228
        %v894 = vpop.permute.xlu0 %893
        %896 = vset.pattern.permute.xlu0 3
        %897 = vperm.xlu0 %896, %v229
        %v898 = vpop.permute.xlu0 %897
        %900 = vset.pattern.permute.xlu0 3
        %901 = vperm.xlu0 %900, %v230
        %v902 = vpop.permute.xlu0 %901
        %904 = vset.pattern.permute.xlu0 3
        %905 = vperm.xlu0 %904, %v231
        %v906 = vpop.permute.xlu0 %905
        %908 = vset.pattern.permute.xlu0 3
        %909 = vperm.xlu0 %908, %v232
        %v910 = vpop.permute.xlu0 %909
        %912 = vset.pattern.permute.xlu0 3
        %913 = vperm.xlu0 %912, %v233
        %v914 = vpop.permute.xlu0 %913
        %916 = vset.pattern.permute.xlu0 3
        %917 = vperm.xlu0 %916, %v234
        %v918 = vpop.permute.xlu0 %917
        %920 = vset.pattern.permute.xlu0 3
        %921 = vperm.xlu0 %920, %v235
        %v922 = vpop.permute.xlu0 %921
        %924 = vset.pattern.permute.xlu0 3
        %925 = vperm.xlu0 %924, %v236
        %v926 = vpop.permute.xlu0 %925
        %928 = vset.pattern.permute.xlu0 3
        %929 = vperm.xlu0 %928, %v237
        %v930 = vpop.permute.xlu0 %929
        %932 = vset.pattern.permute.xlu0 3
        %933 = vperm.xlu0 %932, %v238
        %v934 = vpop.permute.xlu0 %933
        %936 = vset.pattern.permute.xlu0 3
        %937 = vperm.xlu0 %936, %v239
        %v938 = vpop.permute.xlu0 %937
        %940 = vset.pattern.permute.xlu0 3
        %941 = vperm.xlu0 %940, %v240
        %v942 = vpop.permute.xlu0 %941
        %944 = vset.pattern.permute.xlu0 3
        %945 = vperm.xlu0 %944, %v241
        %v946 = vpop.permute.xlu0 %945
        %948 = vset.pattern.permute.xlu0 3
        %949 = vperm.xlu0 %948, %v242
        %v950 = vpop.permute.xlu0 %949
        %952 = vset.pattern.permute.xlu0 3
        %953 = vperm.xlu0 %952, %v243
        %v954 = vpop.permute.xlu0 %953
        %956 = vset.pattern.permute.xlu0 3
        %957 = vperm.xlu0 %956, %v244
        %v958 = vpop.permute.xlu0 %957
        %960 = vset.pattern.permute.xlu0 3
        %961 = vperm.xlu0 %960, %v245
        %v962 = vpop.permute.xlu0 %961
        %964 = vset.pattern.permute.xlu0 3
        %965 = vperm.xlu0 %964, %v246
        %v966 = vpop.permute.xlu0 %965
        %968 = vset.pattern.permute.xlu0 3
        %969 = vperm.xlu0 %968, %v247
        %v970 = vpop.permute.xlu0 %969
        %972 = vset.pattern.permute.xlu0 3
        %973 = vperm.xlu0 %972, %v248
        %v974 = vpop.permute.xlu0 %973
        %976 = vset.pattern.permute.xlu0 3
        %977 = vperm.xlu0 %976, %v249
        %v978 = vpop.permute.xlu0 %977
        %980 = vset.pattern.permute.xlu0 3
        %981 = vperm.xlu0 %980, %v250
        %v982 = vpop.permute.xlu0 %981
        %984 = vset.pattern.permute.xlu0 3
        %985 = vperm.xlu0 %984, %v251
        %v986 = vpop.permute.xlu0 %985
        %988 = vset.pattern.permute.xlu0 3
        %989 = vperm.xlu0 %988, %v252
        %v990 = vpop.permute.xlu0 %989
        %992 = vset.pattern.permute.xlu0 3
        %993 = vperm.xlu0 %992, %v253
        %v994 = vpop.permute.xlu0 %993
        %996 = vset.pattern.permute.xlu0 3
        %997 = vperm.xlu0 %996, %v254
        %v998 = vpop.permute.xlu0 %997
        %1000 = vset.pattern.permute.xlu0 3
        %1001 = vperm.xlu0 %1000, %v255
        %v1002 = vpop.permute.xlu0 %1001
        %1004 = vset.pattern.permute.xlu0 3
        %1005 = vperm.xlu0 %1004, %v256
        %v1006 = vpop.permute.xlu0 %1005
        %1008 = vset.pattern.permute.xlu0 3
        %1009 = vperm.xlu0 %1008, %v257
        %v1010 = vpop.permute.xlu0 %1009
        %1012 = vset.pattern.permute.xlu0 3
        %1013 = vperm.xlu0 %1012, %v258
        %v1014 = vpop.permute.xlu0 %1013
        %v1016 = vlaneseq
        %v1017 = vshrl.u32 %v1016, 7
        %v1018 = vsub.s32 3, %v1017
        %v1019 = vrot.slane %v260, %v1018
        %v1020 = vmul.f32 %v890, %v1019
        %v1021 = vmul.f32 %v894, %v1019
        %v1022 = vmul.f32 %v898, %v1019
        %v1023 = vmul.f32 %v902, %v1019
        %v1024 = vmul.f32 %v906, %v1019
        %v1025 = vmul.f32 %v910, %v1019
        %v1026 = vmul.f32 %v914, %v1019
        %v1027 = vmul.f32 %v918, %v1019
        %v1028 = vmul.f32 %v922, %v1019
        %v1029 = vmul.f32 %v926, %v1019
        %v1030 = vmul.f32 %v930, %v1019
        %v1031 = vmul.f32 %v934, %v1019
        %v1032 = vmul.f32 %v938, %v1019
        %v1033 = vmul.f32 %v942, %v1019
        %v1034 = vmul.f32 %v946, %v1019
        %v1035 = vmul.f32 %v950, %v1019
        %v1036 = vmul.f32 %v954, %v1019
        %v1037 = vmul.f32 %v958, %v1019
        %v1038 = vmul.f32 %v962, %v1019
        %v1039 = vmul.f32 %v966, %v1019
        %v1040 = vmul.f32 %v970, %v1019
        %v1041 = vmul.f32 %v974, %v1019
        %v1042 = vmul.f32 %v978, %v1019
        %v1043 = vmul.f32 %v982, %v1019
        %v1044 = vmul.f32 %v986, %v1019
        %v1045 = vmul.f32 %v990, %v1019
        %v1046 = vmul.f32 %v994, %v1019
        %v1047 = vmul.f32 %v998, %v1019
        %v1048 = vmul.f32 %v1002, %v1019
        %v1049 = vmul.f32 %v1006, %v1019
        %v1050 = vmul.f32 %v1010, %v1019
        %v1051 = vmul.f32 %v1014, %v1019
        %v1052 = vadd.f32 %v856, %v1020
        %v1053 = vadd.f32 %v857, %v1021
        %v1054 = vadd.f32 %v858, %v1022
        %v1055 = vadd.f32 %v859, %v1023
        %v1056 = vadd.f32 %v860, %v1024
        %v1057 = vadd.f32 %v861, %v1025
        %v1058 = vadd.f32 %v862, %v1026
        %v1059 = vadd.f32 %v863, %v1027
        %v1060 = vadd.f32 %v864, %v1028
        %v1061 = vadd.f32 %v865, %v1029
        %v1062 = vadd.f32 %v866, %v1030
        %v1063 = vadd.f32 %v867, %v1031
        %v1064 = vadd.f32 %v868, %v1032
        %v1065 = vadd.f32 %v869, %v1033
        %v1066 = vadd.f32 %v870, %v1034
        %v1067 = vadd.f32 %v871, %v1035
        %v1068 = vadd.f32 %v872, %v1036
        %v1069 = vadd.f32 %v873, %v1037
        %v1070 = vadd.f32 %v874, %v1038
        %v1071 = vadd.f32 %v875, %v1039
        %v1072 = vadd.f32 %v876, %v1040
        %v1073 = vadd.f32 %v877, %v1041
        %v1074 = vadd.f32 %v878, %v1042
        %v1075 = vadd.f32 %v879, %v1043
        %v1076 = vadd.f32 %v880, %v1044
        %v1077 = vadd.f32 %v881, %v1045
        %v1078 = vadd.f32 %v882, %v1046
        %v1079 = vadd.f32 %v883, %v1047
        %v1080 = vadd.f32 %v884, %v1048
        %v1081 = vadd.f32 %v885, %v1049
        %v1082 = vadd.f32 %v886, %v1050
        %v1083 = vadd.f32 %v887, %v1051
        %v1084 = vmax.f32 %v1052, 0.0
        %v1085 = vmax.f32 %v1053, 0.0
        %v1086 = vmax.f32 %v1054, 0.0
        %v1087 = vmax.f32 %v1055, 0.0
        %v1088 = vmax.f32 %v1056, 0.0
        %v1089 = vmax.f32 %v1057, 0.0
        %v1090 = vmax.f32 %v1058, 0.0
        %v1091 = vmax.f32 %v1059, 0.0
        %v1092 = vmax.f32 %v1060, 0.0
        %v1093 = vmax.f32 %v1061, 0.0
        %v1094 = vmax.f32 %v1062, 0.0
        %v1095 = vmax.f32 %v1063, 0.0
        %v1096 = vmax.f32 %v1064, 0.0
        %v1097 = vmax.f32 %v1065, 0.0
        %v1098 = vmax.f32 %v1066, 0.0
        %v1099 = vmax.f32 %v1067, 0.0
        %v1100 = vmax.f32 %v1068, 0.0
        %v1101 = vmax.f32 %v1069, 0.0
        %v1102 = vmax.f32 %v1070, 0.0
        %v1103 = vmax.f32 %v1071, 0.0
        %v1104 = vmax.f32 %v1072, 0.0
        %v1105 = vmax.f32 %v1073, 0.0
        %v1106 = vmax.f32 %v1074, 0.0
        %v1107 = vmax.f32 %v1075, 0.0
        %v1108 = vmax.f32 %v1076, 0.0
        %v1109 = vmax.f32 %v1077, 0.0
        %v1110 = vmax.f32 %v1078, 0.0
        %v1111 = vmax.f32 %v1079, 0.0
        %v1112 = vmax.f32 %v1080, 0.0
        %v1113 = vmax.f32 %v1081, 0.0
        %v1114 = vmax.f32 %v1082, 0.0
        %v1115 = vmax.f32 %v1083, 0.0
        %v1116 = vpack.c.bf16 %v1085, %v1084
        %v1117 = vpack.c.bf16 %v1087, %v1086
        %v1118 = vpack.c.bf16 %v1089, %v1088
        %v1119 = vpack.c.bf16 %v1091, %v1090
        %v1120 = vpack.c.bf16 %v1093, %v1092
        %v1121 = vpack.c.bf16 %v1095, %v1094
        %v1122 = vpack.c.bf16 %v1097, %v1096
        %v1123 = vpack.c.bf16 %v1099, %v1098
        %v1124 = vpack.c.bf16 %v1101, %v1100
        %v1125 = vpack.c.bf16 %v1103, %v1102
        %v1126 = vpack.c.bf16 %v1105, %v1104
        %v1127 = vpack.c.bf16 %v1107, %v1106
        %v1128 = vpack.c.bf16 %v1109, %v1108
        %v1129 = vpack.c.bf16 %v1111, %v1110
        %v1130 = vpack.c.bf16 %v1113, %v1112
        %v1131 = vpack.c.bf16 %v1115, %v1114
        %v1132 = vld [vmem:[%s3] sm:$0xf]
        %v1133 = vld [vmem:[%s3 + $0x4] sm:$0xf]
        %v1134 = vld [vmem:[%s3 + $0x8] sm:$0xf]
        %v1135 = vld [vmem:[%s3 + $0xc] sm:$0xf]
        %v1136 = vld [vmem:[%s3 + $0x10] sm:$0xf]
        %v1137 = vld [vmem:[%s3 + $0x14] sm:$0xf]
        %v1138 = vld [vmem:[%s3 + $0x18] sm:$0xf]
        %v1139 = vld [vmem:[%s3 + $0x1c] sm:$0xf]
        %v1140 = vld [vmem:[%s3 + $0x20] sm:$0xf]
        %v1141 = vld [vmem:[%s3 + $0x24] sm:$0xf]
        %v1142 = vld [vmem:[%s3 + $0x28] sm:$0xf]
        %v1143 = vld [vmem:[%s3 + $0x2c] sm:$0xf]
        %v1144 = vld [vmem:[%s3 + $0x30] sm:$0xf]
        %v1145 = vld [vmem:[%s3 + $0x34] sm:$0xf]
        %v1146 = vld [vmem:[%s3 + $0x38] sm:$0xf]
        %v1147 = vld [vmem:[%s3 + $0x3c] sm:$0xf]
        %v1148 = vld [vmem:[%s4] sm:$0x1]
        %v1150 = vlaneseq
        %v1151 = vshrl.u32 %v1150, 7
        %v1152 = vsub.s32 0, %v1151
        %v1153 = vrot.slane %v1148, %v1152
        %v1171 = vunpack.c.l.b16 %v1132
        %v1172 = vunpack.c.l.b16 %v1133
        %v1173 = vunpack.c.l.b16 %v1134
        %v1174 = vunpack.c.l.b16 %v1135
        %v1175 = vunpack.c.l.b16 %v1136
        %v1176 = vunpack.c.l.b16 %v1137
        %v1177 = vunpack.c.l.b16 %v1138
        %v1178 = vunpack.c.l.b16 %v1139
        %v1179 = vunpack.c.l.b16 %v1140
        %v1180 = vunpack.c.l.b16 %v1141
        %v1181 = vunpack.c.l.b16 %v1142
        %v1182 = vunpack.c.l.b16 %v1143
        %v1183 = vunpack.c.l.b16 %v1144
        %v1184 = vunpack.c.l.b16 %v1145
        %v1185 = vunpack.c.l.b16 %v1146
        %v1186 = vunpack.c.l.b16 %v1147
        %v1187 = vpack.c.b16 %v1172, %v1171
        %v1188 = vpack.c.b16 %v1174, %v1173
        %v1189 = vpack.c.b16 %v1176, %v1175
        %v1190 = vpack.c.b16 %v1178, %v1177
        %v1191 = vpack.c.b16 %v1180, %v1179
        %v1192 = vpack.c.b16 %v1182, %v1181
        %v1193 = vpack.c.b16 %v1184, %v1183
        %v1194 = vpack.c.b16 %v1186, %v1185
        %1203 = vmatprep.subr.bf16.mxu0 0
        %1204 = vmatpush1.bf16.msra.mxu0 %v1187
        %1205 = vmatprep.subr.bf16.mxu0 0
        %1206 = vmatpush1.bf16.msra.mxu0 %v1188
        %1207 = vmatprep.subr.bf16.mxu0 0
        %1208 = vmatpush1.bf16.msra.mxu0 %v1189
        %1209 = vmatprep.subr.bf16.mxu0 0
        %1210 = vmatpush1.bf16.msra.mxu0 %v1190
        %1211 = vmatprep.subr.bf16.mxu0 0
        %1212 = vmatpush1.bf16.msra.mxu0 %v1191
        %1213 = vmatprep.subr.bf16.mxu0 0
        %1214 = vmatpush1.bf16.msra.mxu0 %v1192
        %1215 = vmatprep.subr.bf16.mxu0 0
        %1216 = vmatpush1.bf16.msra.mxu0 %v1193
        %1217 = vmatprep.subr.bf16.mxu0 0
        %1218 = vmatpush1.bf16.msra.mxu0 %v1194
        %1219 = vmatprep.subr.bf16.mxu0 0
        %1220 = vmatpush1.bf16.msra.mxu0 0
        %1221 = vmatprep.subr.bf16.mxu0 0
        %1222 = vmatpush1.bf16.msra.mxu0 0
        %1223 = vmatprep.subr.bf16.mxu0 0
        %1224 = vmatpush1.bf16.msra.mxu0 0
        %1225 = vmatprep.subr.bf16.mxu0 0
        %1226 = vmatpush1.bf16.msra.mxu0 0
        %1227 = vmatprep.subr.bf16.mxu0 0
        %1228 = vmatpush1.bf16.msra.mxu0 0
        %1229 = vmatprep.subr.bf16.mxu0 0
        %1230 = vmatpush1.bf16.msra.mxu0 0
        %1231 = vmatprep.subr.bf16.mxu0 0
        %1232 = vmatpush1.bf16.msra.mxu0 0
        %1233 = vmatprep.subr.bf16.mxu0 0
        %1234 = vmatpush1.bf16.msra.mxu0 0
        %1235 = vmatprep.mubr.bf16.mxu0 0
        %1236 = vmatmul.mubr.bf16.gmra.mrb[0].mxu0 %v1116
        %v1237 = vpop.f32.mrb[0].mxu0
        %v1238 = vadd.f32 %v1153, %v1237
        %v1239 = vpop.f32.mrb[0].mxu0
        %v1240 = vpop.f32.mrb[0].mxu0
        %v1241 = vadd.f32 %v1153, %v1240
        %v1242 = vpop.f32.mrb[0].mxu0
        %1243 = vmatprep.mubr.bf16.mxu0 0
        %1244 = vmatmul.mubr.bf16.gmra.mrb[0].mxu0 %v1117
        %v1245 = vpop.f32.mrb[0].mxu0
        %v1246 = vadd.f32 %v1153, %v1245
        %v1247 = vpop.f32.mrb[0].mxu0
        %v1248 = vpop.f32.mrb[0].mxu0
        %v1249 = vadd.f32 %v1153, %v1248
        %v1250 = vpop.f32.mrb[0].mxu0
        %1251 = vmatprep.mubr.bf16.mxu0 0
        %1252 = vmatmul.mubr.bf16.gmra.mrb[0].mxu0 %v1118
        %v1253 = vpop.f32.mrb[0].mxu0
        %v1254 = vadd.f32 %v1153, %v1253
        %v1255 = vpop.f32.mrb[0].mxu0
        %v1256 = vpop.f32.mrb[0].mxu0
        %v1257 = vadd.f32 %v1153, %v1256
        %v1258 = vpop.f32.mrb[0].mxu0
        %1259 = vmatprep.mubr.bf16.mxu0 0
        %1260 = vmatmul.mubr.bf16.gmra.mrb[0].mxu0 %v1119
        %v1261 = vpop.f32.mrb[0].mxu0
        %v1262 = vadd.f32 %v1153, %v1261
        %v1263 = vpop.f32.mrb[0].mxu0
        %v1264 = vpop.f32.mrb[0].mxu0
        %v1265 = vadd.f32 %v1153, %v1264
        %v1266 = vpop.f32.mrb[0].mxu0
        %1267 = vmatprep.mubr.bf16.mxu0 0
        %1268 = vmatmul.mubr.bf16.gmra.mrb[0].mxu0 %v1120
        %v1269 = vpop.f32.mrb[0].mxu0
        %v1270 = vadd.f32 %v1153, %v1269
        %v1271 = vpop.f32.mrb[0].mxu0
        %v1272 = vpop.f32.mrb[0].mxu0
        %v1273 = vadd.f32 %v1153, %v1272
        %v1274 = vpop.f32.mrb[0].mxu0
        %1275 = vmatprep.mubr.bf16.mxu0 0
        %1276 = vmatmul.mubr.bf16.gmra.mrb[0].mxu0 %v1121
        %v1277 = vpop.f32.mrb[0].mxu0
        %v1278 = vadd.f32 %v1153, %v1277
        %v1279 = vpop.f32.mrb[0].mxu0
        %v1280 = vpop.f32.mrb[0].mxu0
        %v1281 = vadd.f32 %v1153, %v1280
        %v1282 = vpop.f32.mrb[0].mxu0
        %1283 = vmatprep.mubr.bf16.mxu0 0
        %1284 = vmatmul.mubr.bf16.gmra.mrb[0].mxu0 %v1122
        %v1285 = vpop.f32.mrb[0].mxu0
        %v1286 = vadd.f32 %v1153, %v1285
        %v1287 = vpop.f32.mrb[0].mxu0
        %v1288 = vpop.f32.mrb[0].mxu0
        %v1289 = vadd.f32 %v1153, %v1288
        %v1290 = vpop.f32.mrb[0].mxu0
        %1291 = vmatprep.mubr.bf16.mxu0 0
        %1292 = vmatmul.mubr.bf16.gmra.mrb[0].mxu0 %v1123
        %v1293 = vpop.f32.mrb[0].mxu0
        %v1294 = vadd.f32 %v1153, %v1293
        %v1295 = vpop.f32.mrb[0].mxu0
        %v1296 = vpop.f32.mrb[0].mxu0
        %v1297 = vadd.f32 %v1153, %v1296
        %v1298 = vpop.f32.mrb[0].mxu0
        %1299 = vmatprep.mubr.bf16.mxu0 0
        %1300 = vmatmul.mubr.bf16.gmra.mrb[0].mxu0 %v1124
        %v1301 = vpop.f32.mrb[0].mxu0
        %v1302 = vadd.f32 %v1153, %v1301
        %v1303 = vpop.f32.mrb[0].mxu0
        %v1304 = vpop.f32.mrb[0].mxu0
        %v1305 = vadd.f32 %v1153, %v1304
        %v1306 = vpop.f32.mrb[0].mxu0
        %1307 = vmatprep.mubr.bf16.mxu0 0
        %1308 = vmatmul.mubr.bf16.gmra.mrb[0].mxu0 %v1125
        %v1309 = vpop.f32.mrb[0].mxu0
        %v1310 = vadd.f32 %v1153, %v1309
        %v1311 = vpop.f32.mrb[0].mxu0
        %v1312 = vpop.f32.mrb[0].mxu0
        %v1313 = vadd.f32 %v1153, %v1312
        %v1314 = vpop.f32.mrb[0].mxu0
        %1315 = vmatprep.mubr.bf16.mxu0 0
        %1316 = vmatmul.mubr.bf16.gmra.mrb[0].mxu0 %v1126
        %v1317 = vpop.f32.mrb[0].mxu0
        %v1318 = vadd.f32 %v1153, %v1317
        %v1319 = vpop.f32.mrb[0].mxu0
        %v1320 = vpop.f32.mrb[0].mxu0
        %v1321 = vadd.f32 %v1153, %v1320
        %v1322 = vpop.f32.mrb[0].mxu0
        %1323 = vmatprep.mubr.bf16.mxu0 0
        %1324 = vmatmul.mubr.bf16.gmra.mrb[0].mxu0 %v1127
        %v1325 = vpop.f32.mrb[0].mxu0
        %v1326 = vadd.f32 %v1153, %v1325
        %v1327 = vpop.f32.mrb[0].mxu0
        %v1328 = vpop.f32.mrb[0].mxu0
        %v1329 = vadd.f32 %v1153, %v1328
        %v1330 = vpop.f32.mrb[0].mxu0
        %1331 = vmatprep.mubr.bf16.mxu0 0
        %1332 = vmatmul.mubr.bf16.gmra.mrb[0].mxu0 %v1128
        %v1333 = vpop.f32.mrb[0].mxu0
        %v1334 = vadd.f32 %v1153, %v1333
        %v1335 = vpop.f32.mrb[0].mxu0
        %v1336 = vpop.f32.mrb[0].mxu0
        %v1337 = vadd.f32 %v1153, %v1336
        %v1338 = vpop.f32.mrb[0].mxu0
        %1339 = vmatprep.mubr.bf16.mxu0 0
        %1340 = vmatmul.mubr.bf16.gmra.mrb[0].mxu0 %v1129
        %v1341 = vpop.f32.mrb[0].mxu0
        %v1342 = vadd.f32 %v1153, %v1341
        %v1343 = vpop.f32.mrb[0].mxu0
        %v1344 = vpop.f32.mrb[0].mxu0
        %v1345 = vadd.f32 %v1153, %v1344
        %v1346 = vpop.f32.mrb[0].mxu0
        %1347 = vmatprep.mubr.bf16.mxu0 0
        %1348 = vmatmul.mubr.bf16.gmra.mrb[0].mxu0 %v1130
        %v1349 = vpop.f32.mrb[0].mxu0
        %v1350 = vadd.f32 %v1153, %v1349
        %v1351 = vpop.f32.mrb[0].mxu0
        %v1352 = vpop.f32.mrb[0].mxu0
        %v1353 = vadd.f32 %v1153, %v1352
        %v1354 = vpop.f32.mrb[0].mxu0
        %1355 = vmatprep.mubr.bf16.mxu0 0
        %1356 = vmatmul.mubr.bf16.gmra.mrb[0].mxu0 %v1131
        %v1357 = vpop.f32.mrb[0].mxu0
        %v1358 = vadd.f32 %v1153, %v1357
        %v1359 = vpop.f32.mrb[0].mxu0
        %v1360 = vpop.f32.mrb[0].mxu0
        %v1361 = vadd.f32 %v1153, %v1360
        %v1362 = vpop.f32.mrb[0].mxu0
        %1363 = vdwg.mxu0
        %1364 = vst [vmem:[%s218] sm:$0xff] %v1238
        %1365 = vst [vmem:[%s218 + $0x8] sm:$0xff] %v1241
        %1366 = vst [vmem:[%s218 + $0x10] sm:$0xff] %v1246
        %1367 = vst [vmem:[%s218 + $0x18] sm:$0xff] %v1249
        %1368 = vst [vmem:[%s218 + $0x20] sm:$0xff] %v1254
        %1369 = vst [vmem:[%s218 + $0x28] sm:$0xff] %v1257
        %1370 = vst [vmem:[%s218 + $0x30] sm:$0xff] %v1262
        %1371 = vst [vmem:[%s218 + $0x38] sm:$0xff] %v1265
        %1372 = vst [vmem:[%s218 + $0x40] sm:$0xff] %v1270
        %1373 = vst [vmem:[%s218 + $0x48] sm:$0xff] %v1273
        %1374 = vst [vmem:[%s218 + $0x50] sm:$0xff] %v1278
        %1375 = vst [vmem:[%s218 + $0x58] sm:$0xff] %v1281
        %1376 = vst [vmem:[%s218 + $0x60] sm:$0xff] %v1286
        %1377 = vst [vmem:[%s218 + $0x68] sm:$0xff] %v1289
        %1378 = vst [vmem:[%s218 + $0x70] sm:$0xff] %v1294
        %1379 = vst [vmem:[%s218 + $0x78] sm:$0xff] %v1297
        %1380 = vst [vmem:[%s218 + $0x80] sm:$0xff] %v1302
        %1381 = vst [vmem:[%s218 + $0x88] sm:$0xff] %v1305
        %1382 = vst [vmem:[%s218 + $0x90] sm:$0xff] %v1310
        %1383 = vst [vmem:[%s218 + $0x98] sm:$0xff] %v1313
        %1384 = vst [vmem:[%s218 + $0xa0] sm:$0xff] %v1318
        %1385 = vst [vmem:[%s218 + $0xa8] sm:$0xff] %v1321
        %1386 = vst [vmem:[%s218 + $0xb0] sm:$0xff] %v1326
        %1387 = vst [vmem:[%s218 + $0xb8] sm:$0xff] %v1329
        %1388 = vst [vmem:[%s218 + $0xc0] sm:$0xff] %v1334
        %1389 = vst [vmem:[%s218 + $0xc8] sm:$0xff] %v1337
        %1390 = vst [vmem:[%s218 + $0xd0] sm:$0xff] %v1342
        %1391 = vst [vmem:[%s218 + $0xd8] sm:$0xff] %v1345
        %1392 = vst [vmem:[%s218 + $0xe0] sm:$0xff] %v1350
        %1393 = vst [vmem:[%s218 + $0xe8] sm:$0xff] %v1353
        %1394 = vst [vmem:[%s218 + $0xf0] sm:$0xff] %v1358
        %1395 = vst [vmem:[%s218 + $0xf8] sm:$0xff] %v1361
        %s1396 = sand.u32 %s137, 1
        %s1397 = scalar_lea.sflag [#allocation3], %s1396
        %s1398 = sand.u32 %s137, 1
        %s1399 = smul.addr %s1398, 256
        %s1400 = scalar_lea.vmem [#allocation2], %s1399
        // Predicated region
        $region41: #{_forward_padded.1} parent=39 // pred_check
          %p1401 = pneg %p147
        $region42: #{_forward_padded.1} parent=39 // pred_check_branch
          %1403 = sbr.rel (%p1401) target = $region44
        $region43: #{_forward_padded.1} parent=39 // pred_region
          %s1404 = smul.u32 32, %s19
          %s1406 = ssub.s32 4096, 4096
          %1407 = vsyncadd %s1397, %s1406
          %s1408 = smul.addr %s1404, 128
          %s1409 = scalar_lea.hbm %s5, %s1408
          %s1410 = sshll.u32 %s1400, 4
          %s1411 = int_to_ptr.vmem [resolvable:$true] %s1410
          %1416 = dma.vmem_to_hbm [thread:$0]  %s1411, 4096, %s1409, %s1397, 128, 128, 8
        $region44: #{_forward_padded.1} parent=39 // pred_fallthru
          _
      $region40: #{_forward_padded.1} parent=5 // pred_fallthru
        _
      %p1417 = scmp.le.s32.totalorder 2, %s14
      // Predicated region
      $region45: #{_forward_padded.1} parent=5 // pred_check
        %p1418 = pneg %p1417
      $region46: #{_forward_padded.1} parent=5 // pred_check_branch
        %1420 = sbr.rel (%p1418) target = $region48
      $region47: #{_forward_padded.1} parent=5 // pred_region
        %s1421 = ssub.s32 %s14, 2
        // Predicated region
        $region49: #{_forward_padded.1} parent=47 // pred_check
          %p1422 = pneg %p153
        $region50: #{_forward_padded.1} parent=47 // pred_check_branch
          %1424 = sbr.rel (%p1422) target = $region52
        $region51: #{_forward_padded.1} parent=47 // pred_region
          %s1425 = sand.u32 %s138, 1
          %s1426 = scalar_lea.sflag [#allocation3], %s1425
          %s1427 = sand.u32 %s138, 1
          %s1428 = smul.addr %s1427, 256
          %s1429 = scalar_lea.vmem [#allocation2], %s1428
          %1430 = dma.done %s1426, 4096
        $region52: #{_forward_padded.1} parent=47 // pred_fallthru
          _
      $region48: #{_forward_padded.1} parent=5 // pred_fallthru
        _
    $region6: #{_forward_padded.1} parent=1 // loop_footer
      %s18 = sadd.s32 1, %s14
    $region7: #{_forward_padded.1} parent=1 // loop_footer_branch
      %13 = sbr.rel target = $region3
    $region8: #{_forward_padded.1} parent=1 // loop_exit
      _
    %1431 = vsyncpa [#allocation3], 1
    %s1432 = scalar_lea.sflag [#allocation3], 1
    %1433 = vsyncpa %s1432, 1

</llo_original>
